<compile_context>
chip_gen: v7x
topology: tpu7x:2x2x1
jax: 0.10.0
libtpu: 0.0.40
codegen_flags: <defaults>
</compile_context>

<pallas_src>
import jax
import jax.numpy as jnp
from jax import lax
from jax.experimental import pallas as pl
from jax.experimental.pallas import tpu as pltpu


def _lsh_softmax_fwd_kernel(x_ref, w_ref, b_ref, o_ref):
    # x_ref: (B, D)  full input (resident)
    # w_ref: (TN, D) weight slab for this grid step (native nn.Linear layout)
    # b_ref: (1, N)  full bias row (resident), sliced per step
    # o_ref: (B, TN) output logits slab
    j = pl.program_id(0)
    tn = o_ref.shape[1]

    x = x_ref[...]
    w = w_ref[...]
    # Contract last dims of both operands: (B, D) x (TN, D) -> (B, TN).
    # Feeds the MXU directly, no explicit transpose of the weight tile.
    logits = lax.dot_general(
        x, w,
        dimension_numbers=(((1,), (1,)), ((), ())),
        preferred_element_type=jnp.float32,
    )

    start = j * tn
    if tn % 128 == 0:
        start = pl.multiple_of(start, 128)
    bias = b_ref[:, pl.ds(start, tn)]
    o_ref[...] = (logits + bias).astype(o_ref.dtype)


def _vmem_bytes_estimate(B, D, N, tn, w_bytes, x_bytes):
    # Double-buffered inputs/outputs (BlockSpec default) + resident bias.
    return (2 * B * D * x_bytes          # inputs
            + 2 * tn * D * w_bytes       # weight slab (the streaming operand)
            + 2 * 1 * N * 4              # bias (resident)
            + 2 * B * tn * 4)            # output slab


_TILE_CANDIDATES = (2048, 1536, 1024, 768, 512, 384, 256, 128)


def _pick_tn(B, D, N, w_bytes, x_bytes, budget_bytes):
    def fits(c):
        return (N % c == 0
                and _vmem_bytes_estimate(B, D, N, c, w_bytes, x_bytes) <= budget_bytes)

    # Prefer >= 4 grid steps so both v7x TensorCores get work + pipeline slack.
    for c in _TILE_CANDIDATES:
        if c * 4 <= N and fits(c):
            return c
    for c in _TILE_CANDIDATES:
        if c <= N and fits(c):
            return c
    # Fallback: whole N as one block (block_shape equal to array dim is valid).
    return N


def lsh_softmax_forward(inputs, weight, bias, *, tn=None, compute_dtype=None):
    """Dense eval forward: logits = inputs @ weight.T + bias.

    compute_dtype: optional dtype (e.g. jnp.bfloat16) to stream the
    matmul operands in; accumulation is always f32 and bias add / output
    stay f32. Default (None) keeps everything f32 (matches PyTorch exactly).
    """
    B, D = inputs.shape
    N, D_w = weight.shape
    assert D == D_w

    if compute_dtype is not None:
        inputs_c = inputs.astype(compute_dtype)
        weight_c = weight.astype(compute_dtype)
    else:
        inputs_c, weight_c = inputs, weight

    x_bytes = jnp.dtype(inputs_c.dtype).itemsize
    w_bytes = jnp.dtype(weight_c.dtype).itemsize

    # Tile sizing: keep the double-buffered weight slab well inside the scoped
    # VMEM budget (v7x: 64 MiB physical / 32 MiB default; v5e default 16 MiB).
    budget_bytes = 24 << 20
    if tn is None:
        tn = _pick_tn(B, D, N, w_bytes, x_bytes, budget_bytes)
    assert N % tn == 0, "N must be a multiple of the output tile"

    est = _vmem_bytes_estimate(B, D, N, tn, w_bytes, x_bytes)
    vmem_limit = int(min(max(est + (8 << 20), 32 << 20), 40 << 20))

    bias2d = bias.reshape(1, N).astype(jnp.float32)
    grid = (N // tn,)

    return pl.pallas_call(
        _lsh_softmax_fwd_kernel,
        out_shape=jax.ShapeDtypeStruct((B, N), jnp.float32),
        grid_spec=pltpu.PrefetchScalarGridSpec(
            num_scalar_prefetch=0,
            grid=grid,
            in_specs=[
                pl.BlockSpec((B, D), lambda j: (0, 0)),    # inputs (resident)
                pl.BlockSpec((tn, D), lambda j: (j, 0)),   # weight slab (streamed)
                pl.BlockSpec((1, N), lambda j: (0, 0)),    # bias (resident)
            ],
            out_specs=pl.BlockSpec((B, tn), lambda j: (0, j)),
        ),
        compiler_params=pltpu.CompilerParams(
            dimension_semantics=("parallel",),
            vmem_limit_bytes=vmem_limit,
        ),
    )(inputs_c, weight_c, bias2d)


if __name__ == "__main__":
    # Module hyperparameters (LSHSoftmax(N, D, K, L, freq)); K/L/freq only
    # matter for the LSH-sampled training path, which is not implemented here.
    N = 1024  # output vocabulary size (4 grid steps at tn=256)
    D = 128   # hidden dim
    B = 8     # batch of input vectors

    key = jax.random.PRNGKey(0)
    k_x, k_w = jax.random.split(key)

    # Deterministic parameter init matching init_weights():
    #   weight ~ U(-0.05, 0.05), bias = 0
    initrange = 0.05
    weight = jax.random.uniform(
        k_w, (N, D), dtype=jnp.float32, minval=-initrange, maxval=initrange
    )
    bias = jnp.zeros((N,), dtype=jnp.float32)
    inputs = jax.random.normal(k_x, (B, D), dtype=jnp.float32)

    # ---- f32 path (exactly the PyTorch forward semantics) ----
    logits = lsh_softmax_forward(inputs, weight, bias)
    logits = jax.block_until_ready(logits)

    ref = inputs @ weight.T + bias
    assert logits.shape == (B, N)
    assert jnp.allclose(logits, ref, atol=1e-5, rtol=1e-5)

    # ---- optional bf16-streamed path (bandwidth-optimized variant) ----
    logits_bf16 = lsh_softmax_forward(inputs, weight, bias,
                                      compute_dtype=jnp.bfloat16)
    logits_bf16 = jax.block_until_ready(logits_bf16)
    ref_bf16 = jnp.dot(inputs.astype(jnp.bfloat16),
                       weight.astype(jnp.bfloat16).T,
                       preferred_element_type=jnp.float32) + bias
    assert jnp.allclose(logits_bf16, ref_bf16, atol=2e-2, rtol=2e-2)
    assert jnp.allclose(logits_bf16, ref, atol=5e-2, rtol=5e-2)

    print("KERNEL_OK")
</pallas_src>

<mosaic_0001>
module attributes {stable_mosaic.version = 11 : i64} {
  func.func @_lsh_softmax_fwd_kernel(%arg0: i32, %arg1: memref<8x128xf32, #tpu.memory_space<vmem>>, %arg2: memref<256x128xf32, #tpu.memory_space<vmem>>, %arg3: memref<1x1024xf32, #tpu.memory_space<vmem>>, %arg4: memref<8x256xf32, #tpu.memory_space<vmem>>) attributes {dimension_semantics = [#tpu.dimension_semantics<parallel>], iteration_bounds = array<i64: 4>, scalar_prefetch = 0 : i64, scratch_operands = 0 : i64, tpu.core_type = #tpu.core_type<tc>, window_params = [{pipeline_mode = #tpu.pipeline_mode<synchronous>, transform_indices = @transform_0, window_bounds = array<i64: 8, 128>}, {transform_indices = @transform_1, window_bounds = array<i64: 256, 128>}, {pipeline_mode = #tpu.pipeline_mode<synchronous>, transform_indices = @transform_2, window_bounds = array<i64: 1, 1024>}, {transform_indices = @transform_3, window_bounds = array<i64: 8, 256>}]} {
    %c0 = arith.constant 0 : index
    %c0_0 = arith.constant 0 : index
    %0 = vector.load %arg1[%c0, %c0_0] : memref<8x128xf32, #tpu.memory_space<vmem>>, vector<8x128xf32>
    %c0_1 = arith.constant 0 : index
    %c0_2 = arith.constant 0 : index
    %1 = vector.load %arg2[%c0_1, %c0_2] : memref<256x128xf32, #tpu.memory_space<vmem>>, vector<256x128xf32>
    %cst = arith.constant dense<0.000000e+00> : vector<8x256xf32>
    %2 = tpu.matmul %0, %1, %cst {dimension_numbers = #tpu.dot_dimension_numbers<[1], [1], [0], [0], [0, 0, 1, 0], [], []>} : vector<8x128xf32>, vector<256x128xf32>, vector<8x256xf32> -> vector<8x256xf32>
    %c256_i32 = arith.constant 256 : i32
    %3 = arith.muli %arg0, %c256_i32 : i32
    %4 = tpu.assume_multiple %3, 128 : i32
    %c0_3 = arith.constant 0 : index
    %5 = arith.index_cast %4 : i32 to index
    %6 = vector.load %arg3[%c0_3, %5] : memref<1x1024xf32, #tpu.memory_space<vmem>>, vector<1x256xf32>
    %7 = vector.broadcast %6 : vector<1x256xf32> to vector<8x256xf32>
    %8 = arith.addf %2, %7 : vector<8x256xf32>
    %c0_4 = arith.constant 0 : index
    %c0_5 = arith.constant 0 : index
    %9 = vector.load %arg4[%c0_4, %c0_5] : memref<8x256xf32, #tpu.memory_space<vmem>>, vector<8x256xf32>
    tpu.vector_store %arg4[%c0_4, %c0_5], %8 {strides = array<i32>} : memref<8x256xf32, #tpu.memory_space<vmem>>, vector<8x256xf32>,
    return
  }
  func.func @transform_0(%arg0: i32) -> (i32, i32) {
    %c0_i32 = arith.constant 0 : i32
    %c0_i32_0 = arith.constant 0 : i32
    %c0_i32_1 = arith.constant 0 : i32
    return %c0_i32, %c0_i32_0 : i32, i32
  }
  func.func @transform_1(%arg0: i32) -> (i32, i32) {
    %c0_i32 = arith.constant 0 : i32
    %c0_i32_0 = arith.constant 0 : i32
    return %arg0, %c0_i32 : i32, i32
  }
  func.func @transform_2(%arg0: i32) -> (i32, i32) {
    %c0_i32 = arith.constant 0 : i32
    %c0_i32_0 = arith.constant 0 : i32
    %c0_i32_1 = arith.constant 0 : i32
    return %c0_i32, %c0_i32_0 : i32, i32
  }
  func.func @transform_3(%arg0: i32) -> (i32, i32) {
    %c0_i32 = arith.constant 0 : i32
    %c0_i32_0 = arith.constant 0 : i32
    return %c0_i32, %arg0 : i32, i32
  }
}

</mosaic_0001>

<llo_original>
// kernel: tpu_custom_call.1
$region0: #{tpu_custom_call.1}
  #allocation0 [shape = 'u32[]', space=smem, size = 0x4, offset = 0x4, fixed_abs, tag = 'smem constant byte address 0x4 - core index']
  #allocation1 [shape = 'u32[144,128]{1,0:T(1,128)}', space=vmem, size = 0x12000, scoped, tag = 'internal scratch']
  %s0 = inlined_call_operand.hbm [shape: f32[8,128], index: 0, kind: input, shape index: {}]
  %s1 = inlined_call_operand.hbm [shape: f32[1024,128], index: 1, kind: input, shape index: {}]
  %s2 = inlined_call_operand.hbm [shape: f32[1,1024], index: 2, kind: input, shape index: {}]
  %s3 = inlined_call_operand.hbm [shape: f32[8,1024], index: 3, kind: output, shape index: {}]
  %s4 = sld [smem:[#allocation0]]
  $region57: #{tpu_custom_call.1} parent=0
    _
  %s6 = ssub.s32 1, %s4
  %s7 = scalar_select 0, %s6, %s4
  $region1: #{tpu_custom_call.1} parent=0
    #allocation2 [shape = 'u8[4096]{0}', space=vmem, size = 0x1000, scoped, tag = 'input window, operand 0, single buffered']
    #allocation3 [shape = 's32[2]{0}', space=sflag, size = 0x8, scoped, tag = 'scoped memory for tpu_custom_call.1']
    #allocation4 [shape = 's32[2]{0}', space=sflag, size = 0x8, scoped, tag = 'scoped memory for tpu_custom_call.1']
    #allocation5 [shape = 'u8[262144]{0}', space=vmem, size = 0x40000, scoped, tag = 'input window, operand 1']
    #allocation6 [shape = 's32[2]{0}', space=sflag, size = 0x8, scoped, tag = 'scoped memory for tpu_custom_call.1']
    #allocation7 [shape = 'u8[4096]{0}', space=vmem, size = 0x1000, scoped, tag = 'input window, operand 2, single buffered']
    #allocation8 [shape = 'u8[16384]{0}', space=vmem, size = 0x4000, scoped, tag = 'output window, operand 0']
    %8 = vsyncpa [#allocation3], 0
    %9 = vsyncpa [#allocation6], 0
    %s10 = scalar_lea.sflag [#allocation6], 1
    %11 = vsyncpa %s10, 0
    %12 = vsyncpa [#allocation4], 0
    %s13 = scalar_lea.sflag [#allocation4], 1
    %14 = vsyncpa %s13, 0
    loop: start=0, step=1, limit=6
    $region2: #{tpu_custom_call.1} parent=1 // loop_pre_header
      _
    $region3: #{tpu_custom_call.1} parent=1 // loop_header
      %s16 = sphi 0, %s20
      %p17 = scmp.ge.s32.totalorder %s16, 6
      %s24 = sphi 0, %s24
      %s26 = sphi 0, %s24
      %s27 = sphi 0, %s26
      %s41 = sphi 0, %s27
      %s47 = sphi 0, %s49
      %s50 = sphi 0, %s47
      %s51 = sphi 0, %s50
      %s67 = sphi 0, %s51
      %s71 = sphi 0, %s71
      %s73 = sphi 0, %s71
      %s74 = sphi 0, %s73
      %s88 = sphi 0, %s74
      %s94 = sphi 0, %s96
      %s97 = sphi 0, %s94
      %s98 = sphi 0, %s97
      %s114 = sphi 0, %s98
    $region4: #{tpu_custom_call.1} parent=1 // loop_header_branch
      %19 = sbr.rel (%p17) target = $region8
    $region5: #{tpu_custom_call.1} parent=1 // loop_body
      %s21 = ssub.s32 %s16, 1
      %s22 = ssub.s32 %s16, 2
      %s23 = sadd.s32 %s16, 1
      %s25 = sadd.s32 %s24, 1
      %p28 = scmp.eq.s32.totalorder %s16, 3
      %p29 = scmp.ne.s32.totalorder %s24, %s26
      %p30 = scmp.eq.s32.totalorder %s16, 0
      %p31 = por %p29, %p30
      %p32 = scmp.ne.s32.totalorder %s24, %s26
      %p33 = scmp.eq.s32.totalorder %s21, 3
      %p34 = por %p32, %p33
      %p35 = scmp.ne.s32.totalorder %s26, %s27
      %p36 = scmp.eq.s32.totalorder %s21, 0
      %p37 = por %p35, %p36
      %p38 = scmp.ne.s32.totalorder %s26, %s27
      %p39 = scmp.eq.s32.totalorder %s22, 3
      %p40 = por %p38, %p39
      %p42 = scmp.ne.s32.totalorder %s27, %s41
      %p43 = scmp.eq.s32.totalorder %s22, 0
      %p44 = por %p42, %p43
      %s45 = ssub.s32 %s16, %s23
      %p46 = scmp.eq.s32.totalorder %s45, 0
      %s48 = sadd.s32 %s47, 1
      %s49 = scalar_select %p46, %s47, %s48
      %p52 = pneg %p46
      %p53 = scmp.eq.s32.totalorder %s16, 3
      %p54 = por %p52, %p53
      %p55 = scmp.ne.s32.totalorder %s47, %s50
      %p56 = scmp.eq.s32.totalorder %s16, 0
      %p57 = por %p55, %p56
      %p58 = scmp.ne.s32.totalorder %s47, %s50
      %p59 = scmp.eq.s32.totalorder %s21, 3
      %p60 = por %p58, %p59
      %p61 = scmp.ne.s32.totalorder %s50, %s51
      %p62 = scmp.eq.s32.totalorder %s21, 0
      %p63 = por %p61, %p62
      %p64 = scmp.ne.s32.totalorder %s50, %s51
      %p65 = scmp.eq.s32.totalorder %s22, 3
      %p66 = por %p64, %p65
      %p68 = scmp.ne.s32.totalorder %s51, %s67
      %p69 = scmp.eq.s32.totalorder %s22, 0
      %p70 = por %p68, %p69
      %s72 = sadd.s32 %s71, 1
      %p75 = scmp.eq.s32.totalorder %s16, 3
      %p76 = scmp.ne.s32.totalorder %s71, %s73
      %p77 = scmp.eq.s32.totalorder %s16, 0
      %p78 = por %p76, %p77
      %p79 = scmp.ne.s32.totalorder %s71, %s73
      %p80 = scmp.eq.s32.totalorder %s21, 3
      %p81 = por %p79, %p80
      %p82 = scmp.ne.s32.totalorder %s73, %s74
      %p83 = scmp.eq.s32.totalorder %s21, 0
      %p84 = por %p82, %p83
      %p85 = scmp.ne.s32.totalorder %s73, %s74
      %p86 = scmp.eq.s32.totalorder %s22, 3
      %p87 = por %p85, %p86
      %p89 = scmp.ne.s32.totalorder %s74, %s88
      %p90 = scmp.eq.s32.totalorder %s22, 0
      %p91 = por %p89, %p90
      %s92 = ssub.s32 %s16, %s23
      %p93 = scmp.eq.s32.totalorder %s92, 0
      %s95 = sadd.s32 %s94, 1
      %s96 = scalar_select %p93, %s94, %s95
      %p99 = pneg %p93
      %p100 = scmp.eq.s32.totalorder %s16, 3
      %p101 = por %p99, %p100
      %p102 = scmp.ne.s32.totalorder %s94, %s97
      %p103 = scmp.eq.s32.totalorder %s16, 0
      %p104 = por %p102, %p103
      %p105 = scmp.ne.s32.totalorder %s94, %s97
      %p106 = scmp.eq.s32.totalorder %s21, 3
      %p107 = por %p105, %p106
      %p108 = scmp.ne.s32.totalorder %s97, %s98
      %p109 = scmp.eq.s32.totalorder %s21, 0
      %p110 = por %p108, %p109
      %p111 = scmp.ne.s32.totalorder %s97, %s98
      %p112 = scmp.eq.s32.totalorder %s22, 3
      %p113 = por %p111, %p112
      %p115 = scmp.ne.s32.totalorder %s98, %s114
      %p116 = scmp.eq.s32.totalorder %s22, 0
      %p117 = por %p115, %p116
      %p118 = scmp.le.s32.totalorder 1, %s16
      %p119 = scmp.lt.s32.totalorder %s16, 5
      %p120 = pnand %p118, %p119
      %p121 = pneg %p120
      // Predicated region
      $region9: #{tpu_custom_call.1} parent=5 // pred_check
        _
      $region10: #{tpu_custom_call.1} parent=5 // pred_check_branch
        %123 = sbr.rel (%p120) target = $region12
      $region11: #{tpu_custom_call.1} parent=5 // pred_region
        %s124 = ssub.s32 %s16, 1
        // Predicated region
        $region13: #{tpu_custom_call.1} parent=11 // pred_check
          %p125 = pneg %p37
        $region14: #{tpu_custom_call.1} parent=11 // pred_check_branch
          %127 = sbr.rel (%p125) target = $region16
        $region15: #{tpu_custom_call.1} parent=11 // pred_region
          %s129 = ssub.s32 128, 128
          %130 = vsyncadd [#allocation3], %s129
          %s132 = sshll.u32 [#allocation2], 4
          %s133 = int_to_ptr.vmem [resolvable:$true] %s132
          %135 = dma.hbm_to_vmem [thread:$0]  %s0, 128, %s133, [#allocation3]
        $region16: #{tpu_custom_call.1} parent=11 // pred_fallthru
          _
        // Predicated region
        $region17: #{tpu_custom_call.1} parent=11 // pred_check
          %p136 = pneg %p84
        $region18: #{tpu_custom_call.1} parent=11 // pred_check_branch
          %138 = sbr.rel (%p136) target = $region20
        $region19: #{tpu_custom_call.1} parent=11 // pred_region
          %s140 = ssub.s32 128, 128
          %141 = vsyncadd [#allocation6], %s140
          %s143 = sshll.u32 [#allocation7], 4
          %s144 = int_to_ptr.vmem [resolvable:$true] %s143
          %146 = dma.hbm_to_vmem [thread:$0]  %s2, 128, %s144, [#allocation6]
        $region20: #{tpu_custom_call.1} parent=11 // pred_fallthru
          _
      $region12: #{tpu_custom_call.1} parent=5 // pred_fallthru
        _
      %p147 = scmp.lt.s32.totalorder %s16, 4
      // Predicated region
      $region21: #{tpu_custom_call.1} parent=5 // pred_check
        %p148 = pneg %p147
      $region22: #{tpu_custom_call.1} parent=5 // pred_check_branch
        %150 = sbr.rel (%p148) target = $region24
      $region23: #{tpu_custom_call.1} parent=5 // pred_region
        // Predicated region
        $region25: #{tpu_custom_call.1} parent=23 // pred_check
          %p151 = pneg %p57
        $region26: #{tpu_custom_call.1} parent=23 // pred_check_branch
          %153 = sbr.rel (%p151) target = $region28
        $region27: #{tpu_custom_call.1} parent=23 // pred_region
          %s154 = sand.u32 %s16, 1
          %s155 = scalar_lea.sflag [#allocation6], %s154
          %s156 = sand.u32 %s47, 1
          %s157 = smul.addr %s156, 256
          %s158 = scalar_lea.vmem [#allocation5], %s157
          %s159 = smul.u32 32, %s16
          %s161 = ssub.s32 4096, 4096
          %162 = vsyncadd %s155, %s161
          %s163 = smul.addr %s159, 128
          %s164 = scalar_lea.hbm %s1, %s163
          %s165 = sshll.u32 %s158, 4
          %s166 = int_to_ptr.vmem [resolvable:$true] %s165
          %171 = dma.hbm_to_vmem [thread:$0]  %s164, 4096, %s166, %s155, 128, 128, 8
        $region28: #{tpu_custom_call.1} parent=23 // pred_fallthru
          _
      $region24: #{tpu_custom_call.1} parent=5 // pred_fallthru
        _
      %p172 = scmp.le.s32.totalorder 1, %s16
      %p173 = scmp.lt.s32.totalorder %s16, 5
      %p174 = pnand %p172, %p173
      %p175 = pneg %p174
      // Predicated region
      $region29: #{tpu_custom_call.1} parent=5 // pred_check
        _
      $region30: #{tpu_custom_call.1} parent=5 // pred_check_branch
        %177 = sbr.rel (%p174) target = $region32
      $region31: #{tpu_custom_call.1} parent=5 // pred_region
        %s178 = ssub.s32 %s16, 1
        // Predicated region
        $region33: #{tpu_custom_call.1} parent=31 // pred_check
          %p179 = pneg %p37
        $region34: #{tpu_custom_call.1} parent=31 // pred_check_branch
          %181 = sbr.rel (%p179) target = $region36
        $region35: #{tpu_custom_call.1} parent=31 // pred_region
          %182 = dma.done [#allocation3], 128
        $region36: #{tpu_custom_call.1} parent=31 // pred_fallthru
          _
        %s183 = sand.u32 %s21, 1
        %s184 = scalar_lea.sflag [#allocation6], %s183
        %s185 = sand.u32 %s50, 1
        %s186 = smul.addr %s185, 256
        %s187 = scalar_lea.vmem [#allocation5], %s186
        // Predicated region
        $region37: #{tpu_custom_call.1} parent=31 // pred_check
          %p188 = pneg %p63
        $region38: #{tpu_custom_call.1} parent=31 // pred_check_branch
          %190 = sbr.rel (%p188) target = $region40
        $region39: #{tpu_custom_call.1} parent=31 // pred_region
          %191 = dma.done %s184, 4096
        $region40: #{tpu_custom_call.1} parent=31 // pred_fallthru
          _
        // Predicated region
        $region41: #{tpu_custom_call.1} parent=31 // pred_check
          %p192 = pneg %p84
        $region42: #{tpu_custom_call.1} parent=31 // pred_check_branch
          %194 = sbr.rel (%p192) target = $region44
        $region43: #{tpu_custom_call.1} parent=31 // pred_region
          %195 = dma.done [#allocation6], 128
        $region44: #{tpu_custom_call.1} parent=31 // pred_fallthru
          _
        %p196 = pneg %p37
        %p197 = pneg %p34
        %s198 = sand.u32 %s21, 1
        %s199 = scalar_lea.sflag [#allocation6], %s198
        %s200 = sand.u32 %s50, 1
        %s201 = smul.addr %s200, 256
        %s202 = scalar_lea.vmem [#allocation5], %s201
        %p203 = pneg %p63
        %p204 = pneg %p60
        %p205 = pneg %p84
        %p206 = pneg %p81
        %p207 = pneg %p110
        %p208 = pneg %p107
        %s209 = sand.u32 %s97, 1
        %s210 = scalar_lea.sflag [#allocation4], %s209
        %s211 = sand.u32 %s97, 1
        %s212 = smul.addr %s211, 16
        %s213 = scalar_lea.vmem [#allocation8], %s212
        %s214 = smul.u32 32, %s21
        %s215 = smul.u32 2, %s21
        %v216 = vld [vmem:[#allocation2] sm:$0xff]
        %v217 = vld [vmem:[%s187] sm:$0xff]
        %v218 = vld [vmem:[%s187 + $0x8] sm:$0xff]
        %v219 = vld [vmem:[%s187 + $0x10] sm:$0xff]
        %v220 = vld [vmem:[%s187 + $0x18] sm:$0xff]
        %v221 = vld [vmem:[%s187 + $0x20] sm:$0xff]
        %v222 = vld [vmem:[%s187 + $0x28] sm:$0xff]
        %v223 = vld [vmem:[%s187 + $0x30] sm:$0xff]
        %v224 = vld [vmem:[%s187 + $0x38] sm:$0xff]
        %v225 = vld [vmem:[%s187 + $0x40] sm:$0xff]
        %v226 = vld [vmem:[%s187 + $0x48] sm:$0xff]
        %v227 = vld [vmem:[%s187 + $0x50] sm:$0xff]
        %v228 = vld [vmem:[%s187 + $0x58] sm:$0xff]
        %v229 = vld [vmem:[%s187 + $0x60] sm:$0xff]
        %v230 = vld [vmem:[%s187 + $0x68] sm:$0xff]
        %v231 = vld [vmem:[%s187 + $0x70] sm:$0xff]
        %v232 = vld [vmem:[%s187 + $0x78] sm:$0xff]
        %v233 = vld [vmem:[%s187 + $0x80] sm:$0xff]
        %v234 = vld [vmem:[%s187 + $0x88] sm:$0xff]
        %v235 = vld [vmem:[%s187 + $0x90] sm:$0xff]
        %v236 = vld [vmem:[%s187 + $0x98] sm:$0xff]
        %v237 = vld [vmem:[%s187 + $0xa0] sm:$0xff]
        %v238 = vld [vmem:[%s187 + $0xa8] sm:$0xff]
        %v239 = vld [vmem:[%s187 + $0xb0] sm:$0xff]
        %v240 = vld [vmem:[%s187 + $0xb8] sm:$0xff]
        %v241 = vld [vmem:[%s187 + $0xc0] sm:$0xff]
        %v242 = vld [vmem:[%s187 + $0xc8] sm:$0xff]
        %v243 = vld [vmem:[%s187 + $0xd0] sm:$0xff]
        %v244 = vld [vmem:[%s187 + $0xd8] sm:$0xff]
        %v245 = vld [vmem:[%s187 + $0xe0] sm:$0xff]
        %v246 = vld [vmem:[%s187 + $0xe8] sm:$0xff]
        %v247 = vld [vmem:[%s187 + $0xf0] sm:$0xff]
        %v248 = vld [vmem:[%s187 + $0xf8] sm:$0xff]
        %s249 = smul.u32 %s21, 256
        %s250 = sshra.s32 %s249, 7
        %s251 = sand.u32 %s249, 127
        %s252 = scalar_lea.vmem [#allocation7], %s250
        %v253 = vld [vmem:[%s252] sm:$0x3]
        %v255 = vlaneseq
        %v256 = vshrl.u32 %v255, 7
        %v257 = vsub.s32 0, %v256
        %v258 = vrot.slane %v253, %v257
        %v259 = vlaneseq
        %v260 = vshrl.u32 %v259, 7
        %v261 = vsub.s32 1, %v260
        %v262 = vrot.slane %v253, %v261
        %265 = vmatprep.subr.mxu0 0.0
        %266 = vmatpush1.xpose.msra.mxu0 %v217
        %267 = vmatprep.subr.mxu0 0.0
        %268 = vmatpush1.xpose.msra.mxu0 %v218
        %269 = vmatprep.subr.mxu0 0.0
        %270 = vmatpush1.xpose.msra.mxu0 %v219
        %271 = vmatprep.subr.mxu0 0.0
        %272 = vmatpush1.xpose.msra.mxu0 %v220
        %273 = vmatprep.subr.mxu0 0.0
        %274 = vmatpush1.xpose.msra.mxu0 %v221
        %275 = vmatprep.subr.mxu0 0.0
        %276 = vmatpush1.xpose.msra.mxu0 %v222
        %277 = vmatprep.subr.mxu0 0.0
        %278 = vmatpush1.xpose.msra.mxu0 %v223
        %279 = vmatprep.subr.mxu0 0.0
        %280 = vmatpush1.xpose.msra.mxu0 %v224
        %281 = vmatprep.subr.mxu0 0.0
        %282 = vmatpush1.xpose.msra.mxu0 %v225
        %283 = vmatprep.subr.mxu0 0.0
        %284 = vmatpush1.xpose.msra.mxu0 %v226
        %285 = vmatprep.subr.mxu0 0.0
        %286 = vmatpush1.xpose.msra.mxu0 %v227
        %287 = vmatprep.subr.mxu0 0.0
        %288 = vmatpush1.xpose.msra.mxu0 %v228
        %289 = vmatprep.subr.mxu0 0.0
        %290 = vmatpush1.xpose.msra.mxu0 %v229
        %291 = vmatprep.subr.mxu0 0.0
        %292 = vmatpush1.xpose.msra.mxu0 %v230
        %293 = vmatprep.subr.mxu0 0.0
        %294 = vmatpush1.xpose.msra.mxu0 %v231
        %295 = vmatprep.subr.mxu0 0.0
        %296 = vmatpush1.xpose.msra.mxu0 %v232
        %297 = vmatprep.subr.mxu0 0.0
        %298 = vmatpush1.xpose.msra.mxu0 %v233
        %299 = vmatprep.subr.mxu0 0.0
        %300 = vmatpush1.xpose.msra.mxu0 %v234
        %301 = vmatprep.subr.mxu0 0.0
        %302 = vmatpush1.xpose.msra.mxu0 %v235
        %303 = vmatprep.subr.mxu0 0.0
        %304 = vmatpush1.xpose.msra.mxu0 %v236
        %305 = vmatprep.subr.mxu0 0.0
        %306 = vmatpush1.xpose.msra.mxu0 %v237
        %307 = vmatprep.subr.mxu0 0.0
        %308 = vmatpush1.xpose.msra.mxu0 %v238
        %309 = vmatprep.subr.mxu0 0.0
        %310 = vmatpush1.xpose.msra.mxu0 %v239
        %311 = vmatprep.subr.mxu0 0.0
        %312 = vmatpush1.xpose.msra.mxu0 %v240
        %313 = vmatprep.subr.mxu0 0.0
        %314 = vmatpush1.xpose.msra.mxu0 %v241
        %315 = vmatprep.subr.mxu0 0.0
        %316 = vmatpush1.xpose.msra.mxu0 %v242
        %317 = vmatprep.subr.mxu0 0.0
        %318 = vmatpush1.xpose.msra.mxu0 %v243
        %319 = vmatprep.subr.mxu0 0.0
        %320 = vmatpush1.xpose.msra.mxu0 %v244
        %321 = vmatprep.subr.mxu0 0.0
        %322 = vmatpush1.xpose.msra.mxu0 %v245
        %323 = vmatprep.subr.mxu0 0.0
        %324 = vmatpush1.xpose.msra.mxu0 %v246
        %325 = vmatprep.subr.mxu0 0.0
        %326 = vmatpush1.xpose.msra.mxu0 %v247
        %327 = vmatprep.subr.mxu0 0.0
        %328 = vmatpush1.xpose.msra.mxu0 %v248
        %329 = vmatprep.mubr.f32.mxu0 0.0
        %330 = vmatmul.mubr.f32.gmra.mrb[0].mxu0 %v216
        %v331 = vpop.f32.mrb[0].mxu0
        %v332 = vadd.f32 %v258, %v331
        %v333 = vpop.f32.mrb[0].mxu0
        %v334 = vadd.f32 %v262, %v333
        %335 = vdwg.mxu0
        %336 = vst [vmem:[%s213] sm:$0xff] %v332
        %337 = vst [vmem:[%s213 + $0x8] sm:$0xff] %v334
        %s338 = sand.u32 %s97, 1
        %s339 = scalar_lea.sflag [#allocation4], %s338
        %s340 = sand.u32 %s97, 1
        %s341 = smul.addr %s340, 16
        %s342 = scalar_lea.vmem [#allocation8], %s341
        // Predicated region
        $region45: #{tpu_custom_call.1} parent=31 // pred_check
          %p343 = pneg %p107
        $region46: #{tpu_custom_call.1} parent=31 // pred_check_branch
          %345 = sbr.rel (%p343) target = $region48
        $region47: #{tpu_custom_call.1} parent=31 // pred_region
          %s346 = smul.u32 2, %s21
          %s348 = ssub.s32 256, 256
          %349 = vsyncadd %s339, %s348
          %s350 = smul.addr %s346, 128
          %s351 = scalar_lea.hbm %s3, %s350
          %s353 = sshll.u32 %s342, 4
          %s354 = int_to_ptr.vmem [resolvable:$true] %s353
          %356 = dma.vmem_to_hbm [thread:$0]  %s354, 256, %s351, %s339
        $region48: #{tpu_custom_call.1} parent=31 // pred_fallthru
          _
      $region32: #{tpu_custom_call.1} parent=5 // pred_fallthru
        _
      %p357 = scmp.le.s32.totalorder 2, %s16
      // Predicated region
      $region49: #{tpu_custom_call.1} parent=5 // pred_check
        %p358 = pneg %p357
      $region50: #{tpu_custom_call.1} parent=5 // pred_check_branch
        %360 = sbr.rel (%p358) target = $region52
      $region51: #{tpu_custom_call.1} parent=5 // pred_region
        %s361 = ssub.s32 %s16, 2
        // Predicated region
        $region53: #{tpu_custom_call.1} parent=51 // pred_check
          %p362 = pneg %p113
        $region54: #{tpu_custom_call.1} parent=51 // pred_check_branch
          %364 = sbr.rel (%p362) target = $region56
        $region55: #{tpu_custom_call.1} parent=51 // pred_region
          %s365 = sand.u32 %s98, 1
          %s366 = scalar_lea.sflag [#allocation4], %s365
          %s367 = sand.u32 %s98, 1
          %s368 = smul.addr %s367, 16
          %s369 = scalar_lea.vmem [#allocation8], %s368
          %370 = dma.done %s366, 256
        $region56: #{tpu_custom_call.1} parent=51 // pred_fallthru
          _
      $region52: #{tpu_custom_call.1} parent=5 // pred_fallthru
        _
    $region6: #{tpu_custom_call.1} parent=1 // loop_footer
      %s20 = sadd.s32 1, %s16
    $region7: #{tpu_custom_call.1} parent=1 // loop_footer_branch
      %15 = sbr.rel target = $region3
    $region8: #{tpu_custom_call.1} parent=1 // loop_exit
      _
    %371 = vsyncpa [#allocation3], 1
    %s372 = scalar_lea.sflag [#allocation3], 1
    %373 = vsyncpa %s372, 1
    %374 = vsyncpa [#allocation6], 1
    %s375 = scalar_lea.sflag [#allocation6], 1
    %376 = vsyncpa %s375, 1
    %377 = vsyncpa [#allocation4], 1
    %s378 = scalar_lea.sflag [#allocation4], 1
    %379 = vsyncpa %s378, 1

</llo_original>
